<compile_context>
chip_gen: v7x
topology: tpu7x:2x2x1
jax: 0.10.0
libtpu: 0.0.40
codegen_flags: <defaults>
</compile_context>

<pallas_src>
import functools

import jax
import jax.numpy as jnp
from jax.experimental import pallas as pl
from jax.experimental.pallas import tpu as pltpu


# ------------------------------ helpers ------------------------------------


def _pow(x, p):
    """x ** p; repeated multiplies for small positive integer p (VPU friendly)."""
    if isinstance(p, int) and 1 <= p <= 8:
        out = x
        for _ in range(p - 1):
            out = out * x
        return out
    return jnp.power(x, p)


# ------------------------------ kernels ------------------------------------


def _gem_small_kernel(x_ref, o_ref, *, p, eps):
    # Whole problem in one block: x_ref (b, c, hw) ; o_ref (b, c).
    x = x_ref[...].astype(jnp.float32)
    m = jnp.mean(_pow(x, p), axis=-1)
    o_ref[...] = jnp.power(m + eps, 1.0 / p).astype(o_ref.dtype)


def _gem_tiled_kernel(x_ref, o_ref, acc_ref, *, p, eps, hw, hw_blk, ragged):
    # x_ref (1, c_blk, hw_blk) native dtype ; o_ref (1, c_blk) ;
    # acc_ref (1, c_blk) f32 VMEM scratch, resident across the hw grid axis.
    k = pl.program_id(2)

    @pl.when(k == 0)
    def _():
        acc_ref[...] = jnp.zeros_like(acc_ref)

    # Per-chunk upcast only (DMA stays in the input dtype).
    x = x_ref[...].astype(jnp.float32)
    if ragged:
        # Mask the out-of-bounds tail of the last hw block (padding values are
        # unspecified).  where() selects 0 before the pow, so garbage never
        # participates in the sum.
        lane = jax.lax.broadcasted_iota(jnp.int32, x.shape, dimension=2)
        x = jnp.where(k * hw_blk + lane < hw, x, 0.0)

    acc_ref[...] += jnp.sum(_pow(x, p), axis=-1)

    @pl.when(k == pl.num_programs(2) - 1)
    def _():
        m = acc_ref[...] * (1.0 / hw)
        o_ref[...] = jnp.power(m + eps, 1.0 / p).astype(o_ref.dtype)


# ------------------------------ wrapper ------------------------------------

_SMALL_BYTES = 1 << 20   # below this, run the whole problem in a single grid step
_BLOCK_BYTES = 2 << 20   # target per-input-block footprint for the tiled path


def _pick_c_block(c):
    # Prefer a lane-dense (>=128) channel block that divides c; fall back to
    # smaller multiples of 8, else the full dim (always a legal block size).
    for cand in (256, 128, 64, 32, 16, 8):
        if c % cand == 0:
            return cand
    return c


def _pick_hw_block(hw, c_blk, itemsize):
    if hw <= 512:
        return hw                      # single full-dim chunk; no hw tiling
    lanes = max(128, (_BLOCK_BYTES // (c_blk * itemsize)) // 128 * 128)
    return int(min(lanes, pl.cdiv(hw, 128) * 128))


def gem(x, p=3, eps=1e-12, *, force_tiled=False, c_blk=None, hw_blk=None):
    """Generalized-mean pooling.  x: (b, c, h, w) -> (b, c) float32."""
    b, c, h, w = x.shape
    hw = h * w
    x3 = x.reshape(b, c, hw)           # plain-JAX glue reshape (layout only)
    itemsize = jnp.dtype(x.dtype).itemsize

    # ---- tiny-problem fast path: one grid step, no over-gridding ----------
    if not force_tiled and b * c * hw * itemsize <= _SMALL_BYTES:
        kernel = functools.partial(_gem_small_kernel, p=p, eps=eps)
        return pl.pallas_call(
            kernel,
            out_shape=jax.ShapeDtypeStruct((b, c), jnp.float32),
            grid_spec=pltpu.PrefetchScalarGridSpec(
                num_scalar_prefetch=0,
                grid=(1,),
                in_specs=[pl.BlockSpec((b, c, hw), lambda i: (0, 0, 0))],
                out_specs=pl.BlockSpec((b, c), lambda i: (0, 0)),
            ),
            compiler_params=pltpu.CompilerParams(
                dimension_semantics=("arbitrary",),
            ),
        )(x3)

    # ---- tiled path: grid = (b, c-blocks, hw-blocks), hw reduction last ----
    if c_blk is None:
        c_blk = _pick_c_block(c)
    if hw_blk is None:
        hw_blk = _pick_hw_block(hw, c_blk, itemsize)
    assert c % c_blk == 0, "channel block must divide c"
    assert hw_blk == hw or hw_blk % 128 == 0, "hw block must be a lane multiple"

    n_c = c // c_blk
    n_hw = pl.cdiv(hw, hw_blk)
    ragged = (hw % hw_blk) != 0

    kernel = functools.partial(
        _gem_tiled_kernel, p=p, eps=eps, hw=hw, hw_blk=hw_blk, ragged=ragged)

    return pl.pallas_call(
        kernel,
        out_shape=jax.ShapeDtypeStruct((b, c), jnp.float32),
        grid_spec=pltpu.PrefetchScalarGridSpec(
            num_scalar_prefetch=0,
            grid=(b, n_c, n_hw),
            in_specs=[pl.BlockSpec((1, c_blk, hw_blk),
                                   lambda i, j, k: (i, j, k))],
            out_specs=pl.BlockSpec((1, c_blk), lambda i, j, k: (i, j)),
            scratch_shapes=[pltpu.VMEM((1, c_blk), jnp.float32)],
        ),
        compiler_params=pltpu.CompilerParams(
            dimension_semantics=("parallel", "parallel", "arbitrary"),
        ),
    )(x3)


# ------------------------------ reference ----------------------------------


def _gem_ref(x, p=3, eps=1e-12):
    b, c, h, w = x.shape
    xf = x.reshape(b, c, -1).astype(jnp.float32)
    return jnp.power(jnp.mean(xf ** p, axis=-1) + eps, 1.0 / p)


if __name__ == "__main__":
    key = jax.random.PRNGKey(0)
    k1, k2 = jax.random.split(key)

    # Toy shape from the module spec (exercises the small single-step path).
    b, c, h, w = 2, 4, 16, 16
    # GEM sits after ReLU'd backbone features (non-negative); use |N(0,1)| so
    # the fractional 1/p root is well defined, matching reference usage.
    x_small = jnp.abs(jax.random.normal(k1, (b, c, h, w), dtype=jnp.float32))

    out_small = jax.block_until_ready(gem(x_small, p=3, eps=1e-12))
    ref_small = _gem_ref(x_small, p=3, eps=1e-12)
    assert out_small.shape == (b, c), out_small.shape
    assert jnp.allclose(out_small, ref_small, atol=1e-5, rtol=1e-5)

    # Exercise the tiled accumulator path (channel blocks + ragged hw tiling).
    bt, ct, ht, wt = 2, 32, 20, 20          # hw = 400: not a multiple of 128
    x_tiled = jnp.abs(jax.random.normal(k2, (bt, ct, ht, wt), dtype=jnp.float32))
    out_tiled = jax.block_until_ready(
        gem(x_tiled, p=3, eps=1e-12, force_tiled=True, hw_blk=128))
    ref_tiled = _gem_ref(x_tiled, p=3, eps=1e-12)
    assert out_tiled.shape == (bt, ct), out_tiled.shape
    assert jnp.allclose(out_tiled, ref_tiled, atol=1e-4, rtol=1e-4)

    print("KERNEL_OK")
</pallas_src>

<mosaic_0001>
module attributes {stable_mosaic.version = 11 : i64} {
  func.func @_gem_small_kernel(%arg0: i32, %arg1: memref<2x4x256xf32, #tpu.memory_space<vmem>>, %arg2: memref<2x4xf32, #tpu.memory_space<vmem>>) attributes {dimension_semantics = [#tpu.dimension_semantics<arbitrary>], iteration_bounds = array<i64: 1>, scalar_prefetch = 0 : i64, scratch_operands = 0 : i64, tpu.core_type = #tpu.core_type<tc>, window_params = [{pipeline_mode = #tpu.pipeline_mode<synchronous>, transform_indices = @transform_0, window_bounds = array<i64: 2, 4, 256>}, {pipeline_mode = #tpu.pipeline_mode<synchronous>, transform_indices = @transform_1, window_bounds = array<i64: 2, 4>}]} {
    %c0 = arith.constant 0 : index
    %c0_0 = arith.constant 0 : index
    %c0_1 = arith.constant 0 : index
    %0 = vector.load %arg1[%c0, %c0_0, %c0_1] : memref<2x4x256xf32, #tpu.memory_space<vmem>>, vector<2x4x256xf32>
    %1 = arith.mulf %0, %0 : vector<2x4x256xf32>
    %2 = arith.mulf %1, %0 : vector<2x4x256xf32>
    %cst = arith.constant dense<0.000000e+00> : vector<2x4xf32>
    %3 = vector.multi_reduction <add>, %2, %cst [2] : vector<2x4x256xf32> to vector<2x4xf32>
    %cst_2 = arith.constant 2.560000e+02 : f32
    %4 = vector.broadcast %cst_2 : f32 to vector<2x4xf32>
    %5 = arith.divf %3, %4 : vector<2x4xf32>
    %cst_3 = arith.constant 9.99999996E-13 : f32
    %6 = vector.broadcast %cst_3 : f32 to vector<2x4xf32>
    %7 = arith.addf %5, %6 : vector<2x4xf32>
    %cst_4 = arith.constant 0.333333343 : f32
    %8 = vector.broadcast %cst_4 : f32 to vector<2x4xf32>
    %9 = math.powf %7, %8 : vector<2x4xf32>
    %c0_5 = arith.constant 0 : index
    %c0_6 = arith.constant 0 : index
    %10 = vector.load %arg2[%c0_5, %c0_6] : memref<2x4xf32, #tpu.memory_space<vmem>>, vector<2x4xf32>
    tpu.vector_store %arg2[%c0_5, %c0_6], %9 {strides = array<i32>} : memref<2x4xf32, #tpu.memory_space<vmem>>, vector<2x4xf32>,
    return
  }
  func.func @transform_0(%arg0: i32) -> (i32, i32, i32) {
    %c0_i32 = arith.constant 0 : i32
    %c0_i32_0 = arith.constant 0 : i32
    %c0_i32_1 = arith.constant 0 : i32
    %c0_i32_2 = arith.constant 0 : i32
    return %c0_i32, %c0_i32_0, %c0_i32_1 : i32, i32, i32
  }
  func.func @transform_1(%arg0: i32) -> (i32, i32) {
    %c0_i32 = arith.constant 0 : i32
    %c0_i32_0 = arith.constant 0 : i32
    %c0_i32_1 = arith.constant 0 : i32
    return %c0_i32, %c0_i32_0 : i32, i32
  }
}

</mosaic_0001>

<llo_original>
// kernel: tpu_custom_call.1
$region0: #{tpu_custom_call.1}
  #allocation0 [shape = 'u32[]', space=smem, size = 0x4, offset = 0x4, fixed_abs, tag = 'smem constant byte address 0x4 - core index']
  #allocation1 [shape = 'u32[144,128]{1,0:T(1,128)}', space=vmem, size = 0x12000, scoped, tag = 'internal scratch']
  %s0 = inlined_call_operand.hbm [shape: f32[2,4,256], index: 0, kind: input, shape index: {}]
  %s1 = inlined_call_operand.hbm [shape: f32[2,4], index: 1, kind: output, shape index: {}]
  %s2 = sld [smem:[#allocation0]]
  $region18: #{tpu_custom_call.1} parent=0
    _
  %s4 = ssub.s32 1, %s2
  %s5 = scalar_select 0, %s4, %s2
  $region1: #{tpu_custom_call.1} parent=0
    #allocation2 [shape = 'u8[8192]{0}', space=vmem, size = 0x2000, scoped, tag = 'input window, operand 0, single buffered']
    #allocation3 [shape = 's32[1]{0}', space=sflag, size = 0x4, scoped, tag = 'scoped memory for tpu_custom_call.1']
    #allocation4 [shape = 's32[1]{0}', space=sflag, size = 0x4, scoped, tag = 'scoped memory for tpu_custom_call.1']
    #allocation5 [shape = 'u8[1024]{0}', space=vmem, size = 0x400, scoped, tag = 'output window, operand 0, single buffered']
    %6 = vsyncpa [#allocation3], 0
    %7 = vsyncpa [#allocation4], 0
    // Predicated region
    $region2: #{tpu_custom_call.1} parent=1 // pred_check
      _
    $region3: #{tpu_custom_call.1} parent=1 // pred_check_branch
      %9 = sbr.rel (0) target = $region5
    $region4: #{tpu_custom_call.1} parent=1 // pred_region
      %s11 = ssub.s32 256, 256
      %12 = vsyncadd [#allocation3], %s11
      %s13 = sshll.u32 [#allocation2], 4
      %s14 = int_to_ptr.vmem [resolvable:$true] %s13
      %19 = dma.hbm_to_vmem [thread:$0]  %s0, 256, %s14, [#allocation3], 128, 128, 8
    $region5: #{tpu_custom_call.1} parent=1 // pred_fallthru
      _
    // Predicated region
    $region6: #{tpu_custom_call.1} parent=1 // pred_check
      _
    $region7: #{tpu_custom_call.1} parent=1 // pred_check_branch
      %21 = sbr.rel (0) target = $region9
    $region8: #{tpu_custom_call.1} parent=1 // pred_region
      %22 = dma.done [#allocation3], 256
    $region9: #{tpu_custom_call.1} parent=1 // pred_fallthru
      _
    %v23 = vld [vmem:[#allocation2] sm:$0xff]
    %v24 = vld [vmem:[#allocation2 + $0x8] sm:$0xff]
    %v25 = vmul.f32 %v23, %v23
    %v26 = vmul.f32 %v24, %v24
    %v27 = vmul.f32 %v25, %v23
    %v28 = vmul.f32 %v26, %v24
    %v31 = vcombine.high %v27, %v27
    %v32 = vcombine.high %v28, %v28
    %vm35 = vcmask 1043456
    %v36 = vsel %vm35, %v27, 0.0
    %v37 = vsel %vm35, %v31, 0.0
    %v38 = vadd.f32 %v36, %v37
    %39 = vadd.xlane.f32.xlu0 %v38
    %v40 = vpop.xlane.xlu0 %39
    %v41 = vsel %vm35, %v28, 0.0
    %v42 = vsel %vm35, %v32, 0.0
    %v43 = vadd.f32 %v41, %v42
    %44 = vadd.xlane.f32.xlu0 %v43
    %v45 = vpop.xlane.xlu0 %44
    %v46 = vrcp.pop 256.0
    %v47 = vmul.f32 %v40, %v46
    %v48 = vmul.f32 %v45, %v46
    %v49 = vadd.f32 %v47, 1e-12
    %v50 = vadd.f32 %v48, 1e-12
    %v51 = vpow.f32 %v49, 0.33333334
    %v52 = vpow.f32 %v50, 0.33333334
    %v55 = vlaneseq
    %v56 = vand.u32 %v55, 127
    %v57 = vlaneseq
    %v58 = vshrl.u32 %v57, 7
    %v59 = vsub.s32 %v56, %v58
    %v60 = vrot.slane %v51, %v59
    %v61 = vlaneseq
    %v62 = vshrl.u32 %v61, 7
    %v63 = vsub.s32 %v56, %v62
    %v64 = vrot.slane %v52, %v63
    %vm65 = vcmask 1041409
    %v66 = vsel %vm65, %v64, %v60
    %vm68 = vcmask 25600
    %69 = vst.msk [vmem:[#allocation5] sm:$0x3] %vm68, %v66
    // Predicated region
    $region10: #{tpu_custom_call.1} parent=1 // pred_check
      _
    $region11: #{tpu_custom_call.1} parent=1 // pred_check_branch
      %71 = sbr.rel (0) target = $region13
    $region12: #{tpu_custom_call.1} parent=1 // pred_region
      %s73 = ssub.s32 32, 32
      %74 = vsyncadd [#allocation4], %s73
      %s76 = sshll.u32 [#allocation5], 4
      %s77 = int_to_ptr.vmem [resolvable:$true] %s76
      %79 = dma.vmem_to_hbm [thread:$0]  %s77, 32, %s1, [#allocation4]
    $region13: #{tpu_custom_call.1} parent=1 // pred_fallthru
      _
    // Predicated region
    $region14: #{tpu_custom_call.1} parent=1 // pred_check
      _
    $region15: #{tpu_custom_call.1} parent=1 // pred_check_branch
      %81 = sbr.rel (0) target = $region17
    $region16: #{tpu_custom_call.1} parent=1 // pred_region
      %82 = dma.done [#allocation4], 32
    $region17: #{tpu_custom_call.1} parent=1 // pred_fallthru
      _
    %83 = vsyncpa [#allocation3], 1
    %84 = vsyncpa [#allocation4], 1

</llo_original>
